<compile_context>
chip_gen: v7x
topology: tpu7x:2x2x1
jax: 0.10.0
libtpu: 0.0.40
codegen_flags: <defaults>
</compile_context>

<pallas_src>
import functools
import numpy as np
import jax
import jax.numpy as jnp
from jax.experimental import pallas as pl
from jax.experimental.pallas import tpu as pltpu


# ---------------------------------------------------------------------------
# Glue: static pooling matrix with exact PyTorch avg_pool1d semantics.
# ---------------------------------------------------------------------------
def _avg_pool1d_out_len(L, k, s, p, ceil_mode):
    if ceil_mode:
        L_out = -(-(L + 2 * p - k) // s) + 1  # ceil div
        # last window must start inside input-or-left-padding
        if (L_out - 1) * s >= L + p:
            L_out -= 1
    else:
        L_out = (L + 2 * p - k) // s + 1
    return int(L_out)


def build_avgpool_matrix_np(L, kernel_size, stride, padding, ceil_mode, count_include_pad):
    """Dense (L, L_out) f32 matrix encoding PyTorch avg_pool1d window/divisor rules."""
    L_out = _avg_pool1d_out_len(L, kernel_size, stride, padding, ceil_mode)
    W = np.zeros((L, L_out), dtype=np.float32)
    for j in range(L_out):
        hstart = j * stride - padding
        hend = min(hstart + kernel_size, L + padding)          # clipped to padded extent
        pool_size = hend - hstart
        hstart_c = max(hstart, 0)
        hend_c = min(hend, L)
        divisor = pool_size if count_include_pad else (hend_c - hstart_c)
        assert divisor > 0, "avg_pool1d window with zero valid elements (bad padding)"
        W[hstart_c:hend_c, j] = 1.0 / float(divisor)
    return W, L_out


# ---------------------------------------------------------------------------
# Pallas kernel: one row-tile of pooling as a VMEM-resident matmul.
# Each output row depends only on its own input row, so row tiles are independent
# (ragged last tile is safe: OOB output writes are masked by Pallas).
# ---------------------------------------------------------------------------
def _avgpool_matmul_kernel(x_ref, w_ref, o_ref):
    o_ref[...] = jnp.dot(
        x_ref[...], w_ref[...], preferred_element_type=jnp.float32
    ).astype(o_ref.dtype)


# ---------------------------------------------------------------------------
# Tiling / layout policy (generation-aware).
# ---------------------------------------------------------------------------
def _vmem_capacity_bytes():
    try:
        cap = int(getattr(pltpu.get_tpu_info(), "vmem_capacity_bytes"))
        if cap > 0:
            return cap
    except Exception:
        pass
    return 64 << 20  # conservative fallback: v7x per-TensorCore VMEM


def _choose_fold(rows, L, L_out, max_w_bytes=4 << 20, lane=128):
    """Fold factor F: pack F logical rows into the lane axis (block-diagonal W) so the
    output block's last dim approaches >= 128 lanes.  F must divide rows exactly; keep
    W_fold small and keep >= 8 folded rows so row tiling still works."""
    if L_out >= lane or rows <= 1:
        return 1
    f_target = -(-lane // L_out)                                     # ceil(128 / L_out)
    f_cap_w = int(max(1.0, np.sqrt(max_w_bytes / max(4.0 * L * L_out, 1.0))))
    f_cap_rows = max(1, rows // 8)                                   # keep >= 8 folded rows
    f_max = int(max(1, min(f_target, f_cap_w, f_cap_rows, rows)))
    for f in range(f_max, 0, -1):
        if rows % f == 0:
            return f
    return 1


def _choose_tile_rows(rows, in_cols, out_cols, itemsize, budget_bytes, min_steps=8):
    """Row-tile size: a multiple of 8 (or the full row count), capped by the VMEM budget,
    and small enough that large problems get >= min_steps grid steps (DMA/compute
    pipelining + v7x two-TensorCore sharding of the 'parallel' axis)."""
    if rows <= 8:
        return rows
    bytes_per_row = 2 * itemsize * (in_cols + out_cols)      # double-buffered in + out tiles
    cap = max(8, (budget_bytes // max(bytes_per_row, 1)) // 8 * 8)
    per_step = max(8, (-(-rows // min_steps)) // 8 * 8)      # ~rows/min_steps, multiple of 8
    tile = min(cap, per_step)
    if tile >= rows:
        return rows
    return int(tile)


def _resident_w_spec(shape, w_bytes):
    """BlockSpec for the grid-resident pooling matrix (constant index_map).  Single-buffer
    it when it is big enough to matter; silently fall back on jax without pipeline_mode."""
    if w_bytes >= (1 << 20):
        buffered = getattr(pl, "Buffered", None)
        if buffered is not None:
            try:
                return pl.BlockSpec(shape, lambda i: (0, 0), pipeline_mode=buffered(1)), 1
            except TypeError:
                pass
    return pl.BlockSpec(shape, lambda i: (0, 0)), 2


def _pooled_matmul(x2d_folded, W_folded):
    """x2d_folded: (rows_f, Lf), W_folded: (Lf, Lof) -> (rows_f, Lof)."""
    rows_f, Lf = x2d_folded.shape
    Lf_w, Lof = W_folded.shape
    assert Lf == Lf_w
    itemsize = int(jnp.dtype(x2d_folded.dtype).itemsize)
    w_bytes = int(jnp.dtype(W_folded.dtype).itemsize) * Lf * Lof

    cap = _vmem_capacity_bytes()
    w_spec, w_bufs = _resident_w_spec((Lf, Lof), w_bytes)

    # x-tile budget: ~45% of physical VMEM minus the resident W buffers.
    budget = max(4 << 20, int(cap * 0.45) - w_bufs * w_bytes)
    tile_rows = _choose_tile_rows(rows_f, Lf, Lof, itemsize, budget)
    steps = int(pl.cdiv(rows_f, tile_rows))

    tile_bytes = 2 * tile_rows * (Lf + Lof) * itemsize        # double-buffered x / out tiles
    vmem_limit = int(min(cap, max(32 << 20, tile_bytes + w_bufs * w_bytes + (4 << 20))))

    return pl.pallas_call(
        _avgpool_matmul_kernel,
        out_shape=jax.ShapeDtypeStruct((rows_f, Lof), x2d_folded.dtype),
        grid=(steps,),
        in_specs=[
            pl.BlockSpec((tile_rows, Lf), lambda i: (i, 0)),
            w_spec,                                           # W resident across the grid
        ],
        out_specs=pl.BlockSpec((tile_rows, Lof), lambda i: (i, 0)),
        compiler_params=pltpu.CompilerParams(
            dimension_semantics=("parallel",),                # independent row tiles
            vmem_limit_bytes=vmem_limit,
        ),
        cost_estimate=pl.CostEstimate(
            flops=2 * rows_f * Lf * Lof,
            bytes_accessed=itemsize * rows_f * (Lf + Lof) + w_bytes,
            transcendentals=0,
        ),
    )(x2d_folded, W_folded)


# ---------------------------------------------------------------------------
# ZonoAvgPool1d forward
# ---------------------------------------------------------------------------
def zono_avg_pool1d(center, generators, kernel_size, stride=None, padding=0,
                    ceil_mode=False, count_include_pad=True):
    """center: (N, C, L); generators: (G, N, C, L) -> ((N,C,L_out), (G,N,C,L_out))"""
    stride = kernel_size if stride is None else stride
    N, C, L = center.shape
    G = generators.shape[0]

    W_np, L_out = build_avgpool_matrix_np(L, kernel_size, stride, padding,
                                          ceil_mode, count_include_pad)

    def pool_rows(x2d):
        rows = int(x2d.shape[0])
        fold = _choose_fold(rows, L, L_out)
        if fold > 1:
            # Block-diagonal W: lane-dense output without any extra HBM traffic on x
            # (reshape of contiguous leading rows is a free view).
            Wf = np.kron(np.eye(fold, dtype=np.float32), W_np)
        else:
            Wf = W_np
        xf = x2d.reshape(rows // fold, fold * L)
        out_f = _pooled_matmul(xf, jnp.asarray(Wf))
        return out_f.reshape(rows, L_out)

    pooled_center = pool_rows(center.reshape(N * C, L)).reshape(N, C, L_out)
    pooled_generators = pool_rows(generators.reshape(G * N * C, L)).reshape(G, N, C, L_out)
    return pooled_center, pooled_generators


# ---------------------------------------------------------------------------
# Pure-numpy reference (direct PyTorch avg_pool1d re-implementation) for checking.
# ---------------------------------------------------------------------------
def _ref_avg_pool1d(x, k, s, p, ceil_mode, count_include_pad):
    x = np.asarray(x)
    *lead, L = x.shape
    L_out = _avg_pool1d_out_len(L, k, s, p, ceil_mode)
    out = np.zeros((*lead, L_out), dtype=x.dtype)
    for j in range(L_out):
        hstart = j * s - p
        hend = min(hstart + k, L + p)
        pool_size = hend - hstart
        hs, he = max(hstart, 0), min(hend, L)
        div = pool_size if count_include_pad else (he - hs)
        out[..., j] = x[..., hs:he].sum(axis=-1) / div
    return out


if __name__ == "__main__":
    # AvgPool1d config (deterministic, defined in-script)
    kernel_size = 4
    stride = 2
    padding = 1
    ceil_mode = False
    count_include_pad = True

    # Small shapes consistent with the module: zonotope over (N, C, L) tensors.
    N, C, L, G = 2, 4, 16, 3

    key = jax.random.PRNGKey(0)
    kc, kg = jax.random.split(key)
    center = jax.random.normal(kc, (N, C, L), dtype=jnp.float32)
    generators = jax.random.normal(kg, (G, N, C, L), dtype=jnp.float32)

    fwd = jax.jit(functools.partial(
        zono_avg_pool1d,
        kernel_size=kernel_size, stride=stride, padding=padding,
        ceil_mode=ceil_mode, count_include_pad=count_include_pad))

    pooled_center, pooled_generators = fwd(center, generators)
    pooled_center = jax.block_until_ready(pooled_center)
    pooled_generators = jax.block_until_ready(pooled_generators)

    # Verify against the pure-numpy reference (exercises both the unfolded and the
    # lane-folded kernel paths).
    ref_c = _ref_avg_pool1d(np.asarray(center), kernel_size, stride, padding,
                            ceil_mode, count_include_pad)
    ref_g = _ref_avg_pool1d(np.asarray(generators), kernel_size, stride, padding,
                            ceil_mode, count_include_pad)
    np.testing.assert_allclose(np.asarray(pooled_center), ref_c, rtol=1e-5, atol=1e-5)
    np.testing.assert_allclose(np.asarray(pooled_generators), ref_g, rtol=1e-5, atol=1e-5)

    print("KERNEL_OK")
</pallas_src>

<mosaic_0001>
module attributes {stable_mosaic.version = 11 : i64} {
  func.func @_avgpool_matmul_kernel(%arg0: i32, %arg1: memref<8x16xf32, #tpu.memory_space<vmem>>, %arg2: memref<16x8xf32, #tpu.memory_space<vmem>>, %arg3: memref<8x8xf32, #tpu.memory_space<vmem>>) attributes {dimension_semantics = [#tpu.dimension_semantics<parallel>], iteration_bounds = array<i64: 1>, scalar_prefetch = 0 : i64, scratch_operands = 0 : i64, tpu.core_type = #tpu.core_type<tc>, window_params = [{transform_indices = @transform_0, window_bounds = array<i64: 8, 16>}, {pipeline_mode = #tpu.pipeline_mode<synchronous>, transform_indices = @transform_1, window_bounds = array<i64: 16, 8>}, {transform_indices = @transform_2, window_bounds = array<i64: 8, 8>}]} {
    %c0 = arith.constant 0 : index
    %c0_0 = arith.constant 0 : index
    %0 = vector.load %arg1[%c0, %c0_0] : memref<8x16xf32, #tpu.memory_space<vmem>>, vector<8x16xf32>
    %c0_1 = arith.constant 0 : index
    %c0_2 = arith.constant 0 : index
    %1 = vector.load %arg2[%c0_1, %c0_2] : memref<16x8xf32, #tpu.memory_space<vmem>>, vector<16x8xf32>
    %cst = arith.constant dense<0.000000e+00> : vector<8x8xf32>
    %2 = tpu.matmul %0, %1, %cst {dimension_numbers = #tpu.dot_dimension_numbers<[1], [0], [0], [1], [0, 0, 1, 1], [], []>} : vector<8x16xf32>, vector<16x8xf32>, vector<8x8xf32> -> vector<8x8xf32>
    %c0_3 = arith.constant 0 : index
    %c0_4 = arith.constant 0 : index
    %3 = vector.load %arg3[%c0_3, %c0_4] : memref<8x8xf32, #tpu.memory_space<vmem>>, vector<8x8xf32>
    tpu.vector_store %arg3[%c0_3, %c0_4], %2 {strides = array<i32>} : memref<8x8xf32, #tpu.memory_space<vmem>>, vector<8x8xf32>,
    return
  }
  func.func @transform_0(%arg0: i32) -> (i32, i32) {
    %c0_i32 = arith.constant 0 : i32
    %c0_i32_0 = arith.constant 0 : i32
    return %arg0, %c0_i32 : i32, i32
  }
  func.func @transform_1(%arg0: i32) -> (i32, i32) {
    %c0_i32 = arith.constant 0 : i32
    %c0_i32_0 = arith.constant 0 : i32
    %c0_i32_1 = arith.constant 0 : i32
    return %c0_i32, %c0_i32_0 : i32, i32
  }
  func.func @transform_2(%arg0: i32) -> (i32, i32) {
    %c0_i32 = arith.constant 0 : i32
    %c0_i32_0 = arith.constant 0 : i32
    return %arg0, %c0_i32 : i32, i32
  }
}

module attributes {stable_mosaic.version = 11 : i64} {
  func.func @_avgpool_matmul_kernel(%arg0: i32, %arg1: memref<8x48xf32, #tpu.memory_space<vmem>>, %arg2: memref<48x24xf32, #tpu.memory_space<vmem>>, %arg3: memref<8x24xf32, #tpu.memory_space<vmem>>) attributes {dimension_semantics = [#tpu.dimension_semantics<parallel>], iteration_bounds = array<i64: 1>, scalar_prefetch = 0 : i64, scratch_operands = 0 : i64, tpu.core_type = #tpu.core_type<tc>, window_params = [{transform_indices = @transform_0, window_bounds = array<i64: 8, 48>}, {pipeline_mode = #tpu.pipeline_mode<synchronous>, transform_indices = @transform_1, window_bounds = array<i64: 48, 24>}, {transform_indices = @transform_2, window_bounds = array<i64: 8, 24>}]} {
    %c0 = arith.constant 0 : index
    %c0_0 = arith.constant 0 : index
    %0 = vector.load %arg1[%c0, %c0_0] : memref<8x48xf32, #tpu.memory_space<vmem>>, vector<8x48xf32>
    %c0_1 = arith.constant 0 : index
    %c0_2 = arith.constant 0 : index
    %1 = vector.load %arg2[%c0_1, %c0_2] : memref<48x24xf32, #tpu.memory_space<vmem>>, vector<48x24xf32>
    %cst = arith.constant dense<0.000000e+00> : vector<8x24xf32>
    %2 = tpu.matmul %0, %1, %cst {dimension_numbers = #tpu.dot_dimension_numbers<[1], [0], [0], [1], [0, 0, 1, 1], [], []>} : vector<8x48xf32>, vector<48x24xf32>, vector<8x24xf32> -> vector<8x24xf32>
    %c0_3 = arith.constant 0 : index
    %c0_4 = arith.constant 0 : index
    %3 = vector.load %arg3[%c0_3, %c0_4] : memref<8x24xf32, #tpu.memory_space<vmem>>, vector<8x24xf32>
    tpu.vector_store %arg3[%c0_3, %c0_4], %2 {strides = array<i32>} : memref<8x24xf32, #tpu.memory_space<vmem>>, vector<8x24xf32>,
    return
  }
  func.func @transform_0(%arg0: i32) -> (i32, i32) {
    %c0_i32 = arith.constant 0 : i32
    %c0_i32_0 = arith.constant 0 : i32
    return %arg0, %c0_i32 : i32, i32
  }
  func.func @transform_1(%arg0: i32) -> (i32, i32) {
    %c0_i32 = arith.constant 0 : i32
    %c0_i32_0 = arith.constant 0 : i32
    %c0_i32_1 = arith.constant 0 : i32
    return %c0_i32, %c0_i32_0 : i32, i32
  }
  func.func @transform_2(%arg0: i32) -> (i32, i32) {
    %c0_i32 = arith.constant 0 : i32
    %c0_i32_0 = arith.constant 0 : i32
    return %arg0, %c0_i32 : i32, i32
  }
}

</mosaic_0001>

<llo_original>
// kernel: zono_avg_pool1d.2
$region0: #{zono_avg_pool1d.2}
  #allocation0 [shape = 'u32[]', space=smem, size = 0x4, offset = 0x4, fixed_abs, tag = 'smem constant byte address 0x4 - core index']
  #allocation1 [shape = 'u32[144,128]{1,0:T(1,128)}', space=vmem, size = 0x12000, scoped, tag = 'internal scratch']
  %s0 = inlined_call_operand.vmem [shape: f32[8,16], index: 0, kind: input, shape index: {}]
  %s1 = inlined_call_operand.vmem [shape: f32[16,8], index: 1, kind: input, shape index: {}]
  %s2 = inlined_call_operand.hbm [shape: f32[8,8], index: 2, kind: output, shape index: {}]
  %s3 = sld [smem:[#allocation0]]
  $region18: #{zono_avg_pool1d.2} parent=0
    _
  %s5 = ssub.s32 1, %s3
  %s6 = scalar_select 0, %s5, %s3
  $region1: #{zono_avg_pool1d.2} parent=0
    #allocation2 [shape = 'u8[4096]{0}', space=vmem, size = 0x1000, scoped, tag = 'output window, operand 0, single buffered']
    #allocation3 [shape = 's32[1]{0}', space=sflag, size = 0x4, scoped, tag = 'scoped memory for zono_avg_pool1d.2']
    %7 = vsyncpa [#allocation3], 0
    // Predicated region
    $region2: #{zono_avg_pool1d.2} parent=1 // pred_check
      _
    $region3: #{zono_avg_pool1d.2} parent=1 // pred_check_branch
      %9 = sbr.rel (0) target = $region5
    $region4: #{zono_avg_pool1d.2} parent=1 // pred_region
      _
    $region5: #{zono_avg_pool1d.2} parent=1 // pred_fallthru
      _
    // Predicated region
    $region6: #{zono_avg_pool1d.2} parent=1 // pred_check
      _
    $region7: #{zono_avg_pool1d.2} parent=1 // pred_check_branch
      %11 = sbr.rel (0) target = $region9
    $region8: #{zono_avg_pool1d.2} parent=1 // pred_region
      _
    $region9: #{zono_avg_pool1d.2} parent=1 // pred_fallthru
      _
    %v12 = vld [vmem:[%s0] sm:$0xff]
    %v13 = vld [vmem:[%s1] sm:$0xff]
    %v14 = vld [vmem:[%s1 + $0x8] sm:$0xff]
    %vm15 = vcmask 130048
    %v17 = vsel %vm15, %v12, 0
    %19 = vmatprep.subr.mxu0 0.0
    %20 = vmatpush1.msra.mxu0 %v13
    %21 = vmatprep.subr.mxu0 0.0
    %22 = vmatpush1.msra.mxu0 %v14
    %23 = vmatprep.subr.mxu0 0.0
    %24 = vmatpush1.msra.mxu0 0.0
    %25 = vmatprep.subr.mxu0 0.0
    %26 = vmatpush1.msra.mxu0 0.0
    %27 = vmatprep.subr.mxu0 0.0
    %28 = vmatpush1.msra.mxu0 0.0
    %29 = vmatprep.subr.mxu0 0.0
    %30 = vmatpush1.msra.mxu0 0.0
    %31 = vmatprep.subr.mxu0 0.0
    %32 = vmatpush1.msra.mxu0 0.0
    %33 = vmatprep.subr.mxu0 0.0
    %34 = vmatpush1.msra.mxu0 0.0
    %35 = vmatprep.subr.mxu0 0.0
    %36 = vmatpush1.msra.mxu0 0.0
    %37 = vmatprep.subr.mxu0 0.0
    %38 = vmatpush1.msra.mxu0 0.0
    %39 = vmatprep.subr.mxu0 0.0
    %40 = vmatpush1.msra.mxu0 0.0
    %41 = vmatprep.subr.mxu0 0.0
    %42 = vmatpush1.msra.mxu0 0.0
    %43 = vmatprep.subr.mxu0 0.0
    %44 = vmatpush1.msra.mxu0 0.0
    %45 = vmatprep.subr.mxu0 0.0
    %46 = vmatpush1.msra.mxu0 0.0
    %47 = vmatprep.subr.mxu0 0.0
    %48 = vmatpush1.msra.mxu0 0.0
    %49 = vmatprep.subr.mxu0 0.0
    %50 = vmatpush1.msra.mxu0 0.0
    %51 = vmatprep.subr.mxu0 0.0
    %52 = vmatpush1.msra.mxu0 0.0
    %53 = vmatprep.subr.mxu0 0.0
    %54 = vmatpush1.msra.mxu0 0.0
    %55 = vmatprep.subr.mxu0 0.0
    %56 = vmatpush1.msra.mxu0 0.0
    %57 = vmatprep.subr.mxu0 0.0
    %58 = vmatpush1.msra.mxu0 0.0
    %59 = vmatprep.subr.mxu0 0.0
    %60 = vmatpush1.msra.mxu0 0.0
    %61 = vmatprep.subr.mxu0 0.0
    %62 = vmatpush1.msra.mxu0 0.0
    %63 = vmatprep.subr.mxu0 0.0
    %64 = vmatpush1.msra.mxu0 0.0
    %65 = vmatprep.subr.mxu0 0.0
    %66 = vmatpush1.msra.mxu0 0.0
    %67 = vmatprep.subr.mxu0 0.0
    %68 = vmatpush1.msra.mxu0 0.0
    %69 = vmatprep.subr.mxu0 0.0
    %70 = vmatpush1.msra.mxu0 0.0
    %71 = vmatprep.subr.mxu0 0.0
    %72 = vmatpush1.msra.mxu0 0.0
    %73 = vmatprep.subr.mxu0 0.0
    %74 = vmatpush1.msra.mxu0 0.0
    %75 = vmatprep.subr.mxu0 0.0
    %76 = vmatpush1.msra.mxu0 0.0
    %77 = vmatprep.subr.mxu0 0.0
    %78 = vmatpush1.msra.mxu0 0.0
    %79 = vmatprep.subr.mxu0 0.0
    %80 = vmatpush1.msra.mxu0 0.0
    %81 = vmatprep.subr.mxu0 0.0
    %82 = vmatpush1.msra.mxu0 0.0
    %83 = vmatprep.mubr.f32.mxu0 0.0
    %84 = vmatmul.mubr.f32.gmra.mrb[0].mxu0 %v17
    %v85 = vpop.f32.mrb[0].mxu0
    %v86 = vadd.f32 0.0, %v85
    %v87 = vpop.f32.mrb[0].mxu0
    %88 = vdwg.mxu0
    %vm89 = vcmask 64512
    %90 = vst.msk [vmem:[#allocation2] sm:$0xff] %vm89, %v86
    // Predicated region
    $region10: #{zono_avg_pool1d.2} parent=1 // pred_check
      _
    $region11: #{zono_avg_pool1d.2} parent=1 // pred_check_branch
      %92 = sbr.rel (0) target = $region13
    $region12: #{zono_avg_pool1d.2} parent=1 // pred_region
      %s94 = ssub.s32 128, 128
      %95 = vsyncadd [#allocation3], %s94
      %s97 = sshll.u32 [#allocation2], 4
      %s98 = int_to_ptr.vmem [resolvable:$true] %s97
      %100 = dma.vmem_to_hbm [thread:$0]  %s98, 128, %s2, [#allocation3]
    $region13: #{zono_avg_pool1d.2} parent=1 // pred_fallthru
      _
    // Predicated region
    $region14: #{zono_avg_pool1d.2} parent=1 // pred_check
      _
    $region15: #{zono_avg_pool1d.2} parent=1 // pred_check_branch
      %102 = sbr.rel (0) target = $region17
    $region16: #{zono_avg_pool1d.2} parent=1 // pred_region
      %103 = dma.done [#allocation3], 128
    $region17: #{zono_avg_pool1d.2} parent=1 // pred_fallthru
      _
    %104 = vsyncpa [#allocation3], 1

// kernel: zono_avg_pool1d.3
$region0: #{zono_avg_pool1d.3}
  #allocation0 [shape = 'u32[]', space=smem, size = 0x4, offset = 0x4, fixed_abs, tag = 'smem constant byte address 0x4 - core index']
  #allocation1 [shape = 'u32[144,128]{1,0:T(1,128)}', space=vmem, size = 0x12000, scoped, tag = 'internal scratch']
  %s0 = inlined_call_operand.vmem [shape: f32[8,48], index: 0, kind: input, shape index: {}]
  %s1 = inlined_call_operand.hbm [shape: f32[48,24], index: 1, kind: input, shape index: {}]
  %s2 = inlined_call_operand.vmem [shape: f32[8,24], index: 2, kind: output, shape index: {}]
  %s3 = sld [smem:[#allocation0]]
  $region22: #{zono_avg_pool1d.3} parent=0
    _
  %s5 = ssub.s32 1, %s3
  %s6 = scalar_select 0, %s5, %s3
  $region1: #{zono_avg_pool1d.3} parent=0
    #allocation2 [shape = 'u8[24576]{0}', space=vmem, size = 0x6000, scoped, tag = 'input window, operand 1, single buffered']
    #allocation3 [shape = 's32[1]{0}', space=sflag, size = 0x4, scoped, tag = 'scoped memory for zono_avg_pool1d.3']
    %7 = vsyncpa [#allocation3], 0
    // Predicated region
    $region2: #{zono_avg_pool1d.3} parent=1 // pred_check
      _
    $region3: #{zono_avg_pool1d.3} parent=1 // pred_check_branch
      %9 = sbr.rel (0) target = $region5
    $region4: #{zono_avg_pool1d.3} parent=1 // pred_region
      _
    $region5: #{zono_avg_pool1d.3} parent=1 // pred_fallthru
      _
    // Predicated region
    $region6: #{zono_avg_pool1d.3} parent=1 // pred_check
      _
    $region7: #{zono_avg_pool1d.3} parent=1 // pred_check_branch
      %11 = sbr.rel (0) target = $region9
    $region8: #{zono_avg_pool1d.3} parent=1 // pred_region
      %s13 = ssub.s32 768, 768
      %14 = vsyncadd [#allocation3], %s13
      %s15 = sshll.u32 [#allocation2], 4
      %s16 = int_to_ptr.vmem [resolvable:$true] %s15
      %21 = dma.hbm_to_vmem [thread:$0]  %s1, 768, %s16, [#allocation3], 128, 128, 8
    $region9: #{zono_avg_pool1d.3} parent=1 // pred_fallthru
      _
    // Predicated region
    $region10: #{zono_avg_pool1d.3} parent=1 // pred_check
      _
    $region11: #{zono_avg_pool1d.3} parent=1 // pred_check_branch
      %23 = sbr.rel (0) target = $region13
    $region12: #{zono_avg_pool1d.3} parent=1 // pred_region
      %24 = dma.done [#allocation3], 768
    $region13: #{zono_avg_pool1d.3} parent=1 // pred_fallthru
      _
    %v25 = vld [vmem:[%s0] sm:$0xff]
    %v26 = vld [vmem:[#allocation2] sm:$0xff]
    %v27 = vld [vmem:[#allocation2 + $0x8] sm:$0xff]
    %v28 = vld [vmem:[#allocation2 + $0x10] sm:$0xff]
    %v29 = vld [vmem:[#allocation2 + $0x18] sm:$0xff]
    %v30 = vld [vmem:[#allocation2 + $0x20] sm:$0xff]
    %v31 = vld [vmem:[#allocation2 + $0x28] sm:$0xff]
    %vm32 = vcmask 392192
    %v34 = vsel %vm32, %v25, 0
    %36 = vmatprep.subr.mxu0 0.0
    %37 = vmatpush1.msra.mxu0 %v26
    %38 = vmatprep.subr.mxu0 0.0
    %39 = vmatpush1.msra.mxu0 %v27
    %40 = vmatprep.subr.mxu0 0.0
    %41 = vmatpush1.msra.mxu0 %v28
    %42 = vmatprep.subr.mxu0 0.0
    %43 = vmatpush1.msra.mxu0 %v29
    %44 = vmatprep.subr.mxu0 0.0
    %45 = vmatpush1.msra.mxu0 %v30
    %46 = vmatprep.subr.mxu0 0.0
    %47 = vmatpush1.msra.mxu0 %v31
    %48 = vmatprep.subr.mxu0 0.0
    %49 = vmatpush1.msra.mxu0 0.0
    %50 = vmatprep.subr.mxu0 0.0
    %51 = vmatpush1.msra.mxu0 0.0
    %52 = vmatprep.subr.mxu0 0.0
    %53 = vmatpush1.msra.mxu0 0.0
    %54 = vmatprep.subr.mxu0 0.0
    %55 = vmatpush1.msra.mxu0 0.0
    %56 = vmatprep.subr.mxu0 0.0
    %57 = vmatpush1.msra.mxu0 0.0
    %58 = vmatprep.subr.mxu0 0.0
    %59 = vmatpush1.msra.mxu0 0.0
    %60 = vmatprep.subr.mxu0 0.0
    %61 = vmatpush1.msra.mxu0 0.0
    %62 = vmatprep.subr.mxu0 0.0
    %63 = vmatpush1.msra.mxu0 0.0
    %64 = vmatprep.subr.mxu0 0.0
    %65 = vmatpush1.msra.mxu0 0.0
    %66 = vmatprep.subr.mxu0 0.0
    %67 = vmatpush1.msra.mxu0 0.0
    %68 = vmatprep.subr.mxu0 0.0
    %69 = vmatpush1.msra.mxu0 0.0
    %70 = vmatprep.subr.mxu0 0.0
    %71 = vmatpush1.msra.mxu0 0.0
    %72 = vmatprep.subr.mxu0 0.0
    %73 = vmatpush1.msra.mxu0 0.0
    %74 = vmatprep.subr.mxu0 0.0
    %75 = vmatpush1.msra.mxu0 0.0
    %76 = vmatprep.subr.mxu0 0.0
    %77 = vmatpush1.msra.mxu0 0.0
    %78 = vmatprep.subr.mxu0 0.0
    %79 = vmatpush1.msra.mxu0 0.0
    %80 = vmatprep.subr.mxu0 0.0
    %81 = vmatpush1.msra.mxu0 0.0
    %82 = vmatprep.subr.mxu0 0.0
    %83 = vmatpush1.msra.mxu0 0.0
    %84 = vmatprep.subr.mxu0 0.0
    %85 = vmatpush1.msra.mxu0 0.0
    %86 = vmatprep.subr.mxu0 0.0
    %87 = vmatpush1.msra.mxu0 0.0
    %88 = vmatprep.subr.mxu0 0.0
    %89 = vmatpush1.msra.mxu0 0.0
    %90 = vmatprep.subr.mxu0 0.0
    %91 = vmatpush1.msra.mxu0 0.0
    %92 = vmatprep.subr.mxu0 0.0
    %93 = vmatpush1.msra.mxu0 0.0
    %94 = vmatprep.subr.mxu0 0.0
    %95 = vmatpush1.msra.mxu0 0.0
    %96 = vmatprep.subr.mxu0 0.0
    %97 = vmatpush1.msra.mxu0 0.0
    %98 = vmatprep.subr.mxu0 0.0
    %99 = vmatpush1.msra.mxu0 0.0
    %100 = vmatprep.mubr.f32.mxu0 0.0
    %101 = vmatmul.mubr.f32.gmra.mrb[0].mxu0 %v34
    %v102 = vpop.f32.mrb[0].mxu0
    %v103 = vadd.f32 0.0, %v102
    %v104 = vpop.f32.mrb[0].mxu0
    %105 = vdwg.mxu0
    %vm106 = vcmask 195584
    %107 = vst.msk [vmem:[%s2] sm:$0xff] %vm106, %v103
    // Predicated region
    $region14: #{zono_avg_pool1d.3} parent=1 // pred_check
      _
    $region15: #{zono_avg_pool1d.3} parent=1 // pred_check_branch
      %109 = sbr.rel (0) target = $region17
    $region16: #{zono_avg_pool1d.3} parent=1 // pred_region
      _
    $region17: #{zono_avg_pool1d.3} parent=1 // pred_fallthru
      _
    // Predicated region
    $region18: #{zono_avg_pool1d.3} parent=1 // pred_check
      _
    $region19: #{zono_avg_pool1d.3} parent=1 // pred_check_branch
      %111 = sbr.rel (0) target = $region21
    $region20: #{zono_avg_pool1d.3} parent=1 // pred_region
      _
    $region21: #{zono_avg_pool1d.3} parent=1 // pred_fallthru
      _
    %112 = vsyncpa [#allocation3], 1

</llo_original>
